<compile_context>
chip_gen: v7x
topology: tpu7x:2x2x1
jax: 0.10.0
libtpu: 0.0.40
codegen_flags: <defaults>
</compile_context>

<pallas_src>
import functools

import jax
import jax.numpy as jnp
from jax import lax
from jax.experimental import pallas as pl
from jax.experimental.pallas import tpu as pltpu


# ---------------------------------------------------------------------------
# Fused kernel: per-timestep input projection + tanh recurrence + classifier.
#   grid = (B_blocks, T_blocks); h persists in VMEM scratch across T_blocks.
# ---------------------------------------------------------------------------
def rnn_fused_kernel(x_ref, w_ih_ref, w_hh_ref, b_ref, w_out_ref, b_out_ref,
                     out_ref, h_ref, *, t_block):
    # x_ref:     (Tt, tb, H) bf16  embedded inputs for this (batch, time) block
    # w_ih_ref:  (H, H)  bf16      W_ih^T (resident)
    # w_hh_ref:  (H, H)  bf16      W_hh^T (resident)
    # b_ref:     (1, H)  f32       b_ih + b_hh
    # w_out_ref: (1, H)  f32       classifier weight row
    # b_out_ref: (1, 1)  f32
    # out_ref:   (tb, 1) f32
    # h_ref:     (tb, H) f32       VMEM scratch (persists across the T grid axis)
    ti = pl.program_id(1)

    @pl.when(ti == 0)
    def _():
        h_ref[...] = jnp.zeros_like(h_ref)

    w_ih = w_ih_ref[...]            # bf16, hoisted out of the step loop
    w_hh = w_hh_ref[...]            # bf16
    b = b_ref[...]                  # f32

    def step(i, h):
        # h_t = tanh(x_t @ W_ih^T + b_ih + h_{t-1} @ W_hh^T + b_hh)
        # bf16 MXU operands, f32 accumulation; elementwise math stays f32.
        px = jnp.dot(x_ref[i], w_ih, preferred_element_type=jnp.float32) + b
        hh = jnp.dot(h.astype(jnp.bfloat16), w_hh,
                     preferred_element_type=jnp.float32)
        return jnp.tanh(px + hh)

    h = lax.fori_loop(0, t_block, step, h_ref[...], unroll=True)
    h_ref[...] = h

    @pl.when(ti == pl.num_programs(1) - 1)
    def _():
        # out_features == 1: VPU multiply + cross-lane reduction instead of a
        # lane-width-1 MXU matmul, fused with the sigmoid.
        logits = (jnp.sum(h * w_out_ref[...], axis=-1, keepdims=True)
                  + b_out_ref[...])
        out_ref[...] = 1.0 / (1.0 + jnp.exp(-logits))


def _pick_tile(n, cap):
    """Largest divisor of n that is <= cap (>= 1)."""
    d = max(1, min(n, cap))
    while n % d:
        d -= 1
    return d


def simple_rnn_forward(tokens, params, *, t_block=8, max_batch_block=256):
    """tokens: int32 (B, T). Returns probabilities (B,) float32."""
    emb_table = params["embedding"]                     # (V, H) f32
    w_ih_t = params["w_ih_t"].astype(jnp.bfloat16)      # (H, H) = W_ih.T
    w_hh_t = params["w_hh_t"].astype(jnp.bfloat16)      # (H, H) = W_hh.T
    b = params["b"]                                     # (1, H) = b_ih + b_hh
    w_out_row = params["w_out_row"]                     # (1, H)
    b_out = params["b_out"]                             # (1, 1)

    B, T = tokens.shape
    H = emb_table.shape[1]

    # Embedding gather, time-major, in bf16 (halves the HBM write+read of the
    # big activation tensor; no separate (B,T,H)->(T,B,H) transpose pass).
    # TODO(synk): fuse the gather into the kernel via scalar-prefetched token
    #             ids (PrefetchScalarGridSpec + pl.Element row gather) so the
    #             embedded sequence never materializes in HBM at all.
    x_tm = emb_table.astype(jnp.bfloat16)[tokens.T]     # (T, B, H) bf16

    # Tile choices: Tt timesteps per grid step; batch block tb (full batch at
    # small B, multiple-of-8 shards at large B so v7x can split across TCs).
    Tt = _pick_tile(T, t_block)
    tb = B
    if B > max_batch_block:
        cand = _pick_tile(B, max_batch_block)
        if cand % 8 == 0:
            tb = cand
    nb, nt = B // tb, T // Tt

    # Explicit scoped-VMEM budget (double-buffered inputs + resident weights +
    # h scratch), clamped to stay inside v7x's 64 MiB physical VMEM.
    vmem_bytes = (
        2 * Tt * tb * H * 2          # x block, double buffered, bf16
        + 2 * 2 * H * H * 2          # two (H,H) bf16 weights, double buffered
        + 4 * (2 * H + 2) * 4        # small f32 vectors / scalars (generous)
        + 2 * tb * 4                 # output block
        + tb * H * 4                 # h scratch
    )
    vmem_limit = int(min(max(4 * vmem_bytes, 16 << 20), 64 << 20))

    out = pl.pallas_call(
        functools.partial(rnn_fused_kernel, t_block=Tt),
        out_shape=jax.ShapeDtypeStruct((B, 1), jnp.float32),
        grid=(nb, nt),
        in_specs=[
            pl.BlockSpec((Tt, tb, H), lambda bi, ti: (ti, bi, 0)),  # streamed
            # TODO(synk): at large H (>= ~1024) single-buffer these
            # constant-index weight blocks (pipeline_mode=pl.Buffered(1) or a
            # one-shot DMA into VMEM scratch) and tile the output columns to
            # stay inside v7x's 64 MiB VMEM.
            pl.BlockSpec((H, H), lambda bi, ti: (0, 0)),            # W_ih^T
            pl.BlockSpec((H, H), lambda bi, ti: (0, 0)),            # W_hh^T
            pl.BlockSpec((1, H), lambda bi, ti: (0, 0)),            # bias
            pl.BlockSpec((1, H), lambda bi, ti: (0, 0)),            # classifier w
            pl.BlockSpec((1, 1), lambda bi, ti: (0, 0)),            # classifier b
        ],
        out_specs=pl.BlockSpec((tb, 1), lambda bi, ti: (bi, 0)),    # written at last ti
        scratch_shapes=[pltpu.VMEM((tb, H), jnp.float32)],          # h state
        compiler_params=pltpu.CompilerParams(
            dimension_semantics=("parallel", "arbitrary"),
            vmem_limit_bytes=vmem_limit),
    )(x_tm, w_ih_t, w_hh_t, b, w_out_row, b_out)

    return out[:, 0]                                    # sigmoid(logits).squeeze(-1)


def init_params(key, vocab_size, hidden_size):
    """Deterministic init mimicking PyTorch defaults (uniform +/- 1/sqrt(H))."""
    ks = jax.random.split(key, 7)
    bound = 1.0 / jnp.sqrt(hidden_size)
    emb = jax.random.normal(ks[0], (vocab_size, hidden_size), jnp.float32)
    w_ih = jax.random.uniform(ks[1], (hidden_size, hidden_size), jnp.float32,
                              -bound, bound)
    w_hh = jax.random.uniform(ks[2], (hidden_size, hidden_size), jnp.float32,
                              -bound, bound)
    b_ih = jax.random.uniform(ks[3], (hidden_size,), jnp.float32, -bound, bound)
    b_hh = jax.random.uniform(ks[4], (hidden_size,), jnp.float32, -bound, bound)
    w_cls = jax.random.uniform(ks[5], (1, hidden_size), jnp.float32, -bound, bound)
    b_cls = jax.random.uniform(ks[6], (1,), jnp.float32, -bound, bound)
    return {
        "embedding": emb,
        "w_ih_t": w_ih.T,                       # (H, H)
        "w_hh_t": w_hh.T,                       # (H, H)
        "b": (b_ih + b_hh).reshape(1, hidden_size),
        "w_out_row": w_cls,                     # (1, H)
        "b_out": b_cls.reshape(1, 1),
    }


def reference_forward(tokens, params):
    """Pure-JAX f32 reference matching the PyTorch module semantics."""
    emb = params["embedding"][tokens].astype(jnp.float32)   # (B, T, H)
    B, T, H = emb.shape
    h = jnp.zeros((B, H), jnp.float32)
    for t in range(T):
        h = jnp.tanh(emb[:, t, :] @ params["w_ih_t"] + params["b"]
                     + h @ params["w_hh_t"])
    logits = jnp.sum(h * params["w_out_row"], axis=-1) + params["b_out"][0, 0]
    return jax.nn.sigmoid(logits)


if __name__ == "__main__":
    vocab_size = 16
    hidden_size = 32
    batch = 2
    seq = 8

    key = jax.random.PRNGKey(0)
    k_tok, k_params = jax.random.split(key)
    tokens = jax.random.randint(k_tok, (batch, seq), 0, vocab_size, jnp.int32)
    params = init_params(k_params, vocab_size, hidden_size)

    probs = simple_rnn_forward(tokens, params)
    probs = jax.block_until_ready(probs)

    ref = reference_forward(tokens, params)
    assert probs.shape == (batch,)
    # Tolerance loosened vs. the pure-f32 version: MXU operands are bf16 now
    # (f32 accumulation), so results differ from the f32 reference slightly.
    assert jnp.allclose(probs, ref, atol=2e-2, rtol=2e-2), (probs, ref)

    print("KERNEL_OK")
</pallas_src>

<mosaic_0001>
module attributes {stable_mosaic.version = 11 : i64} {
  func.func @rnn_fused_kernel(%arg0: i32, %arg1: i32, %arg2: memref<8x2x32xbf16, #tpu.memory_space<vmem>>, %arg3: memref<32x32xbf16, #tpu.memory_space<vmem>>, %arg4: memref<32x32xbf16, #tpu.memory_space<vmem>>, %arg5: memref<1x32xf32, #tpu.memory_space<vmem>>, %arg6: memref<1x32xf32, #tpu.memory_space<vmem>>, %arg7: memref<1x1xf32, #tpu.memory_space<vmem>>, %arg8: memref<2x1xf32, #tpu.memory_space<vmem>>, %arg9: memref<2x32xf32, #tpu.memory_space<vmem>>) attributes {dimension_semantics = [#tpu.dimension_semantics<parallel>, #tpu.dimension_semantics<arbitrary>], iteration_bounds = array<i64: 1, 1>, scalar_prefetch = 0 : i64, scratch_operands = 1 : i64, tpu.core_type = #tpu.core_type<tc>, window_params = [{transform_indices = @transform_0, window_bounds = array<i64: 8, 2, 32>}, {pipeline_mode = #tpu.pipeline_mode<synchronous>, transform_indices = @transform_1, window_bounds = array<i64: 32, 32>}, {pipeline_mode = #tpu.pipeline_mode<synchronous>, transform_indices = @transform_2, window_bounds = array<i64: 32, 32>}, {pipeline_mode = #tpu.pipeline_mode<synchronous>, transform_indices = @transform_3, window_bounds = array<i64: 1, 32>}, {pipeline_mode = #tpu.pipeline_mode<synchronous>, transform_indices = @transform_4, window_bounds = array<i64: 1, 32>}, {pipeline_mode = #tpu.pipeline_mode<synchronous>, transform_indices = @transform_5, window_bounds = array<i64: 1, 1>}, {transform_indices = @transform_6, window_bounds = array<i64: 2, 1>}]} {
    %c0_i32 = arith.constant 0 : i32
    %0 = arith.cmpi eq, %arg1, %c0_i32 : i32
    %1 = arith.extui %0 : i1 to i32
    %c0_i32_0 = arith.constant 0 : i32
    %2 = arith.cmpi ne, %1, %c0_i32_0 : i32
    scf.if %2 {
      %cst_44 = arith.constant 0.000000e+00 : f32
      %91 = vector.broadcast %cst_44 : f32 to vector<2x32xf32>
      %c0_45 = arith.constant 0 : index
      %c0_46 = arith.constant 0 : index
      %92 = vector.load %arg9[%c0_45, %c0_46] : memref<2x32xf32, #tpu.memory_space<vmem>>, vector<2x32xf32>
      tpu.vector_store %arg9[%c0_45, %c0_46], %91 {strides = array<i32>} : memref<2x32xf32, #tpu.memory_space<vmem>>, vector<2x32xf32>,
    } else {
    }
    %c0 = arith.constant 0 : index
    %c0_1 = arith.constant 0 : index
    %3 = vector.load %arg3[%c0, %c0_1] : memref<32x32xbf16, #tpu.memory_space<vmem>>, vector<32x32xbf16>
    %c0_2 = arith.constant 0 : index
    %c0_3 = arith.constant 0 : index
    %4 = vector.load %arg4[%c0_2, %c0_3] : memref<32x32xbf16, #tpu.memory_space<vmem>>, vector<32x32xbf16>
    %c0_4 = arith.constant 0 : index
    %c0_5 = arith.constant 0 : index
    %5 = vector.load %arg5[%c0_4, %c0_5] : memref<1x32xf32, #tpu.memory_space<vmem>>, vector<1x32xf32>
    %c0_6 = arith.constant 0 : index
    %c0_7 = arith.constant 0 : index
    %6 = vector.load %arg9[%c0_6, %c0_7] : memref<2x32xf32, #tpu.memory_space<vmem>>, vector<2x32xf32>
    %c0_i32_8 = arith.constant 0 : i32
    %7 = arith.index_cast %c0_i32_8 : i32 to index
    %c0_9 = arith.constant 0 : index
    %c0_10 = arith.constant 0 : index
    %8 = vector.load %arg2[%7, %c0_9, %c0_10] : memref<8x2x32xbf16, #tpu.memory_space<vmem>>, vector<1x2x32xbf16>
    %9 = vector.shape_cast %8 : vector<1x2x32xbf16> to vector<2x32xbf16>
    %cst = arith.constant dense<0.000000e+00> : vector<2x32xf32>
    %10 = tpu.matmul %9, %3, %cst {dimension_numbers = #tpu.dot_dimension_numbers<[1], [0], [0], [1], [0, 0, 1, 1], [], []>} : vector<2x32xbf16>, vector<32x32xbf16>, vector<2x32xf32> -> vector<2x32xf32>
    %11 = vector.broadcast %5 : vector<1x32xf32> to vector<2x32xf32>
    %12 = arith.addf %10, %11 : vector<2x32xf32>
    %13 = arith.truncf %6 : vector<2x32xf32> to vector<2x32xbf16>
    %cst_11 = arith.constant dense<0.000000e+00> : vector<2x32xf32>
    %14 = tpu.matmul %13, %4, %cst_11 {dimension_numbers = #tpu.dot_dimension_numbers<[1], [0], [0], [1], [0, 0, 1, 1], [], []>} : vector<2x32xbf16>, vector<32x32xbf16>, vector<2x32xf32> -> vector<2x32xf32>
    %15 = arith.addf %12, %14 : vector<2x32xf32>
    %16 = math.tanh %15 : vector<2x32xf32>
    %c1_i32 = arith.constant 1 : i32
    %17 = arith.index_cast %c1_i32 : i32 to index
    %c0_12 = arith.constant 0 : index
    %c0_13 = arith.constant 0 : index
    %18 = vector.load %arg2[%17, %c0_12, %c0_13] : memref<8x2x32xbf16, #tpu.memory_space<vmem>>, vector<1x2x32xbf16>
    %19 = vector.shape_cast %18 : vector<1x2x32xbf16> to vector<2x32xbf16>
    %cst_14 = arith.constant dense<0.000000e+00> : vector<2x32xf32>
    %20 = tpu.matmul %19, %3, %cst_14 {dimension_numbers = #tpu.dot_dimension_numbers<[1], [0], [0], [1], [0, 0, 1, 1], [], []>} : vector<2x32xbf16>, vector<32x32xbf16>, vector<2x32xf32> -> vector<2x32xf32>
    %21 = vector.broadcast %5 : vector<1x32xf32> to vector<2x32xf32>
    %22 = arith.addf %20, %21 : vector<2x32xf32>
    %23 = arith.truncf %16 : vector<2x32xf32> to vector<2x32xbf16>
    %cst_15 = arith.constant dense<0.000000e+00> : vector<2x32xf32>
    %24 = tpu.matmul %23, %4, %cst_15 {dimension_numbers = #tpu.dot_dimension_numbers<[1], [0], [0], [1], [0, 0, 1, 1], [], []>} : vector<2x32xbf16>, vector<32x32xbf16>, vector<2x32xf32> -> vector<2x32xf32>
    %25 = arith.addf %22, %24 : vector<2x32xf32>
    %26 = math.tanh %25 : vector<2x32xf32>
    %c2_i32 = arith.constant 2 : i32
    %27 = arith.index_cast %c2_i32 : i32 to index
    %c0_16 = arith.constant 0 : index
    %c0_17 = arith.constant 0 : index
    %28 = vector.load %arg2[%27, %c0_16, %c0_17] : memref<8x2x32xbf16, #tpu.memory_space<vmem>>, vector<1x2x32xbf16>
    %29 = vector.shape_cast %28 : vector<1x2x32xbf16> to vector<2x32xbf16>
    %cst_18 = arith.constant dense<0.000000e+00> : vector<2x32xf32>
    %30 = tpu.matmul %29, %3, %cst_18 {dimension_numbers = #tpu.dot_dimension_numbers<[1], [0], [0], [1], [0, 0, 1, 1], [], []>} : vector<2x32xbf16>, vector<32x32xbf16>, vector<2x32xf32> -> vector<2x32xf32>
    %31 = vector.broadcast %5 : vector<1x32xf32> to vector<2x32xf32>
    %32 = arith.addf %30, %31 : vector<2x32xf32>
    %33 = arith.truncf %26 : vector<2x32xf32> to vector<2x32xbf16>
    %cst_19 = arith.constant dense<0.000000e+00> : vector<2x32xf32>
    %34 = tpu.matmul %33, %4, %cst_19 {dimension_numbers = #tpu.dot_dimension_numbers<[1], [0], [0], [1], [0, 0, 1, 1], [], []>} : vector<2x32xbf16>, vector<32x32xbf16>, vector<2x32xf32> -> vector<2x32xf32>
    %35 = arith.addf %32, %34 : vector<2x32xf32>
    %36 = math.tanh %35 : vector<2x32xf32>
    %c3_i32 = arith.constant 3 : i32
    %37 = arith.index_cast %c3_i32 : i32 to index
    %c0_20 = arith.constant 0 : index
    %c0_21 = arith.constant 0 : index
    %38 = vector.load %arg2[%37, %c0_20, %c0_21] : memref<8x2x32xbf16, #tpu.memory_space<vmem>>, vector<1x2x32xbf16>
    %39 = vector.shape_cast %38 : vector<1x2x32xbf16> to vector<2x32xbf16>
    %cst_22 = arith.constant dense<0.000000e+00> : vector<2x32xf32>
    %40 = tpu.matmul %39, %3, %cst_22 {dimension_numbers = #tpu.dot_dimension_numbers<[1], [0], [0], [1], [0, 0, 1, 1], [], []>} : vector<2x32xbf16>, vector<32x32xbf16>, vector<2x32xf32> -> vector<2x32xf32>
    %41 = vector.broadcast %5 : vector<1x32xf32> to vector<2x32xf32>
    %42 = arith.addf %40, %41 : vector<2x32xf32>
    %43 = arith.truncf %36 : vector<2x32xf32> to vector<2x32xbf16>
    %cst_23 = arith.constant dense<0.000000e+00> : vector<2x32xf32>
    %44 = tpu.matmul %43, %4, %cst_23 {dimension_numbers = #tpu.dot_dimension_numbers<[1], [0], [0], [1], [0, 0, 1, 1], [], []>} : vector<2x32xbf16>, vector<32x32xbf16>, vector<2x32xf32> -> vector<2x32xf32>
    %45 = arith.addf %42, %44 : vector<2x32xf32>
    %46 = math.tanh %45 : vector<2x32xf32>
    %c4_i32 = arith.constant 4 : i32
    %47 = arith.index_cast %c4_i32 : i32 to index
    %c0_24 = arith.constant 0 : index
    %c0_25 = arith.constant 0 : index
    %48 = vector.load %arg2[%47, %c0_24, %c0_25] : memref<8x2x32xbf16, #tpu.memory_space<vmem>>, vector<1x2x32xbf16>
    %49 = vector.shape_cast %48 : vector<1x2x32xbf16> to vector<2x32xbf16>
    %cst_26 = arith.constant dense<0.000000e+00> : vector<2x32xf32>
    %50 = tpu.matmul %49, %3, %cst_26 {dimension_numbers = #tpu.dot_dimension_numbers<[1], [0], [0], [1], [0, 0, 1, 1], [], []>} : vector<2x32xbf16>, vector<32x32xbf16>, vector<2x32xf32> -> vector<2x32xf32>
    %51 = vector.broadcast %5 : vector<1x32xf32> to vector<2x32xf32>
    %52 = arith.addf %50, %51 : vector<2x32xf32>
    %53 = arith.truncf %46 : vector<2x32xf32> to vector<2x32xbf16>
    %cst_27 = arith.constant dense<0.000000e+00> : vector<2x32xf32>
    %54 = tpu.matmul %53, %4, %cst_27 {dimension_numbers = #tpu.dot_dimension_numbers<[1], [0], [0], [1], [0, 0, 1, 1], [], []>} : vector<2x32xbf16>, vector<32x32xbf16>, vector<2x32xf32> -> vector<2x32xf32>
    %55 = arith.addf %52, %54 : vector<2x32xf32>
    %56 = math.tanh %55 : vector<2x32xf32>
    %c5_i32 = arith.constant 5 : i32
    %57 = arith.index_cast %c5_i32 : i32 to index
    %c0_28 = arith.constant 0 : index
    %c0_29 = arith.constant 0 : index
    %58 = vector.load %arg2[%57, %c0_28, %c0_29] : memref<8x2x32xbf16, #tpu.memory_space<vmem>>, vector<1x2x32xbf16>
    %59 = vector.shape_cast %58 : vector<1x2x32xbf16> to vector<2x32xbf16>
    %cst_30 = arith.constant dense<0.000000e+00> : vector<2x32xf32>
    %60 = tpu.matmul %59, %3, %cst_30 {dimension_numbers = #tpu.dot_dimension_numbers<[1], [0], [0], [1], [0, 0, 1, 1], [], []>} : vector<2x32xbf16>, vector<32x32xbf16>, vector<2x32xf32> -> vector<2x32xf32>
    %61 = vector.broadcast %5 : vector<1x32xf32> to vector<2x32xf32>
    %62 = arith.addf %60, %61 : vector<2x32xf32>
    %63 = arith.truncf %56 : vector<2x32xf32> to vector<2x32xbf16>
    %cst_31 = arith.constant dense<0.000000e+00> : vector<2x32xf32>
    %64 = tpu.matmul %63, %4, %cst_31 {dimension_numbers = #tpu.dot_dimension_numbers<[1], [0], [0], [1], [0, 0, 1, 1], [], []>} : vector<2x32xbf16>, vector<32x32xbf16>, vector<2x32xf32> -> vector<2x32xf32>
    %65 = arith.addf %62, %64 : vector<2x32xf32>
    %66 = math.tanh %65 : vector<2x32xf32>
    %c6_i32 = arith.constant 6 : i32
    %67 = arith.index_cast %c6_i32 : i32 to index
    %c0_32 = arith.constant 0 : index
    %c0_33 = arith.constant 0 : index
    %68 = vector.load %arg2[%67, %c0_32, %c0_33] : memref<8x2x32xbf16, #tpu.memory_space<vmem>>, vector<1x2x32xbf16>
    %69 = vector.shape_cast %68 : vector<1x2x32xbf16> to vector<2x32xbf16>
    %cst_34 = arith.constant dense<0.000000e+00> : vector<2x32xf32>
    %70 = tpu.matmul %69, %3, %cst_34 {dimension_numbers = #tpu.dot_dimension_numbers<[1], [0], [0], [1], [0, 0, 1, 1], [], []>} : vector<2x32xbf16>, vector<32x32xbf16>, vector<2x32xf32> -> vector<2x32xf32>
    %71 = vector.broadcast %5 : vector<1x32xf32> to vector<2x32xf32>
    %72 = arith.addf %70, %71 : vector<2x32xf32>
    %73 = arith.truncf %66 : vector<2x32xf32> to vector<2x32xbf16>
    %cst_35 = arith.constant dense<0.000000e+00> : vector<2x32xf32>
    %74 = tpu.matmul %73, %4, %cst_35 {dimension_numbers = #tpu.dot_dimension_numbers<[1], [0], [0], [1], [0, 0, 1, 1], [], []>} : vector<2x32xbf16>, vector<32x32xbf16>, vector<2x32xf32> -> vector<2x32xf32>
    %75 = arith.addf %72, %74 : vector<2x32xf32>
    %76 = math.tanh %75 : vector<2x32xf32>
    %c7_i32 = arith.constant 7 : i32
    %77 = arith.index_cast %c7_i32 : i32 to index
    %c0_36 = arith.constant 0 : index
    %c0_37 = arith.constant 0 : index
    %78 = vector.load %arg2[%77, %c0_36, %c0_37] : memref<8x2x32xbf16, #tpu.memory_space<vmem>>, vector<1x2x32xbf16>
    %79 = vector.shape_cast %78 : vector<1x2x32xbf16> to vector<2x32xbf16>
    %cst_38 = arith.constant dense<0.000000e+00> : vector<2x32xf32>
    %80 = tpu.matmul %79, %3, %cst_38 {dimension_numbers = #tpu.dot_dimension_numbers<[1], [0], [0], [1], [0, 0, 1, 1], [], []>} : vector<2x32xbf16>, vector<32x32xbf16>, vector<2x32xf32> -> vector<2x32xf32>
    %81 = vector.broadcast %5 : vector<1x32xf32> to vector<2x32xf32>
    %82 = arith.addf %80, %81 : vector<2x32xf32>
    %83 = arith.truncf %76 : vector<2x32xf32> to vector<2x32xbf16>
    %cst_39 = arith.constant dense<0.000000e+00> : vector<2x32xf32>
    %84 = tpu.matmul %83, %4, %cst_39 {dimension_numbers = #tpu.dot_dimension_numbers<[1], [0], [0], [1], [0, 0, 1, 1], [], []>} : vector<2x32xbf16>, vector<32x32xbf16>, vector<2x32xf32> -> vector<2x32xf32>
    %85 = arith.addf %82, %84 : vector<2x32xf32>
    %86 = math.tanh %85 : vector<2x32xf32>
    %c8_i32 = arith.constant 8 : i32
    %c0_40 = arith.constant 0 : index
    %c0_41 = arith.constant 0 : index
    %87 = vector.load %arg9[%c0_40, %c0_41] : memref<2x32xf32, #tpu.memory_space<vmem>>, vector<2x32xf32>
    tpu.vector_store %arg9[%c0_40, %c0_41], %86 {strides = array<i32>} : memref<2x32xf32, #tpu.memory_space<vmem>>, vector<2x32xf32>,
    %c0_i32_42 = arith.constant 0 : i32
    %88 = arith.cmpi eq, %arg1, %c0_i32_42 : i32
    %89 = arith.extui %88 : i1 to i32
    %c0_i32_43 = arith.constant 0 : i32
    %90 = arith.cmpi ne, %89, %c0_i32_43 : i32
    scf.if %90 {
      %c0_44 = arith.constant 0 : index
      %c0_45 = arith.constant 0 : index
      %91 = vector.load %arg6[%c0_44, %c0_45] : memref<1x32xf32, #tpu.memory_space<vmem>>, vector<1x32xf32>
      %92 = vector.broadcast %91 : vector<1x32xf32> to vector<2x32xf32>
      %93 = arith.mulf %86, %92 : vector<2x32xf32>
      %cst_46 = arith.constant dense<0.000000e+00> : vector<2xf32>
      %94 = vector.multi_reduction <add>, %93, %cst_46 [1] : vector<2x32xf32> to vector<2xf32>
      %95 = vector.shape_cast %94 : vector<2xf32> to vector<2x1xf32>
      %c0_47 = arith.constant 0 : index
      %c0_48 = arith.constant 0 : index
      %96 = vector.load %arg7[%c0_47, %c0_48] : memref<1x1xf32, #tpu.memory_space<vmem>>, vector<1x1xf32>
      %97 = vector.broadcast %96 : vector<1x1xf32> to vector<2x1xf32>
      %98 = arith.addf %95, %97 : vector<2x1xf32>
      %cst_49 = arith.constant 0.000000e+00 : f32
      %99 = vector.broadcast %cst_49 : f32 to vector<2x1xf32>
      %100 = arith.subf %99, %98 : vector<2x1xf32>
      %101 = math.exp %100 : vector<2x1xf32>
      %cst_50 = arith.constant 1.000000e+00 : f32
      %102 = vector.broadcast %cst_50 : f32 to vector<2x1xf32>
      %103 = arith.addf %102, %101 : vector<2x1xf32>
      %cst_51 = arith.constant 1.000000e+00 : f32
      %104 = vector.broadcast %cst_51 : f32 to vector<2x1xf32>
      %105 = arith.divf %104, %103 : vector<2x1xf32>
      %c0_52 = arith.constant 0 : index
      %c0_53 = arith.constant 0 : index
      %106 = vector.load %arg8[%c0_52, %c0_53] : memref<2x1xf32, #tpu.memory_space<vmem>>, vector<2x1xf32>
      tpu.vector_store %arg8[%c0_52, %c0_53], %105 {strides = array<i32>} : memref<2x1xf32, #tpu.memory_space<vmem>>, vector<2x1xf32>,
    } else {
    }
    return
  }
  func.func @transform_0(%arg0: i32, %arg1: i32) -> (i32, i32, i32) {
    %c0_i32 = arith.constant 0 : i32
    %c0_i32_0 = arith.constant 0 : i32
    return %arg1, %arg0, %c0_i32 : i32, i32, i32
  }
  func.func @transform_1(%arg0: i32, %arg1: i32) -> (i32, i32) {
    %c0_i32 = arith.constant 0 : i32
    %c0_i32_0 = arith.constant 0 : i32
    %c0_i32_1 = arith.constant 0 : i32
    return %c0_i32, %c0_i32_0 : i32, i32
  }
  func.func @transform_2(%arg0: i32, %arg1: i32) -> (i32, i32) {
    %c0_i32 = arith.constant 0 : i32
    %c0_i32_0 = arith.constant 0 : i32
    %c0_i32_1 = arith.constant 0 : i32
    return %c0_i32, %c0_i32_0 : i32, i32
  }
  func.func @transform_3(%arg0: i32, %arg1: i32) -> (i32, i32) {
    %c0_i32 = arith.constant 0 : i32
    %c0_i32_0 = arith.constant 0 : i32
    %c0_i32_1 = arith.constant 0 : i32
    return %c0_i32, %c0_i32_0 : i32, i32
  }
  func.func @transform_4(%arg0: i32, %arg1: i32) -> (i32, i32) {
    %c0_i32 = arith.constant 0 : i32
    %c0_i32_0 = arith.constant 0 : i32
    %c0_i32_1 = arith.constant 0 : i32
    return %c0_i32, %c0_i32_0 : i32, i32
  }
  func.func @transform_5(%arg0: i32, %arg1: i32) -> (i32, i32) {
    %c0_i32 = arith.constant 0 : i32
    %c0_i32_0 = arith.constant 0 : i32
    %c0_i32_1 = arith.constant 0 : i32
    return %c0_i32, %c0_i32_0 : i32, i32
  }
  func.func @transform_6(%arg0: i32, %arg1: i32) -> (i32, i32) {
    %c0_i32 = arith.constant 0 : i32
    %c0_i32_0 = arith.constant 0 : i32
    return %arg0, %c0_i32 : i32, i32
  }
}

</mosaic_0001>

<llo_original>
// kernel: tpu_custom_call.1
$region0: #{tpu_custom_call.1}
  #allocation0 [shape = 'u32[]', space=smem, size = 0x4, offset = 0x4, fixed_abs, tag = 'smem constant byte address 0x4 - core index']
  #allocation1 [shape = 'u32[144,128]{1,0:T(1,128)}', space=vmem, size = 0x12000, scoped, tag = 'internal scratch']
  #allocation2 [shape = 'f32[2,32]{1,0:T(2,128)}', space=vmem, size = 0x400, scoped, tag = 'scratch operand']
  #allocation3 [shape = 'f32[1,1]{1,0:T(1,128)S(1)}', space=vmem, size = 0x200, scoped, tag = 'scoped memory for tpu_custom_call.1']
  %s0 = inlined_call_operand.hbm [shape: bf16[8,2,32], index: 0, kind: input, shape index: {}]
  %s1 = inlined_call_operand.hbm [shape: bf16[32,32], index: 1, kind: input, shape index: {}]
  %s2 = inlined_call_operand.hbm [shape: bf16[32,32], index: 2, kind: input, shape index: {}]
  %s3 = inlined_call_operand.vmem [shape: f32[1,32], index: 3, kind: input, shape index: {}]
  %s4 = inlined_call_operand.vmem [shape: f32[1,32], index: 4, kind: input, shape index: {}]
  %s5 = inlined_call_operand.<no memory space> [shape: f32[1,1], index: 5, kind: input, shape index: {}]
  %s6 = inlined_call_operand.vmem [shape: f32[2,1], index: 6, kind: output, shape index: {}]
  %s7 = sld [smem:[#allocation0]]
  $region54: #{tpu_custom_call.1} parent=0
    _
  %s9 = ssub.s32 1, %s7
  %s10 = scalar_select 0, %s9, %s7
  %v11 = vstv %s5
  %12 = vst [vmem:[#allocation3] sm:$0x1] %v11
  $region1: #{tpu_custom_call.1} parent=0
    #allocation4 [shape = 'u8[4096]{0}', space=vmem, size = 0x1000, scoped, tag = 'input window, operand 0, single buffered']
    #allocation5 [shape = 's32[1]{0}', space=sflag, size = 0x4, scoped, tag = 'scoped memory for tpu_custom_call.1']
    #allocation6 [shape = 'u8[8192]{0}', space=vmem, size = 0x2000, scoped, tag = 'input window, operand 1, single buffered']
    #allocation7 [shape = 's32[1]{0}', space=sflag, size = 0x4, scoped, tag = 'scoped memory for tpu_custom_call.1']
    #allocation8 [shape = 'u8[8192]{0}', space=vmem, size = 0x2000, scoped, tag = 'input window, operand 2, single buffered']
    %13 = vsyncpa [#allocation5], 0
    %14 = vsyncpa [#allocation7], 0
    // Predicated region
    $region2: #{tpu_custom_call.1} parent=1 // pred_check
      _
    $region3: #{tpu_custom_call.1} parent=1 // pred_check_branch
      %16 = sbr.rel (0) target = $region5
    $region4: #{tpu_custom_call.1} parent=1 // pred_region
      %s18 = ssub.s32 128, 128
      %19 = vsyncadd [#allocation5], %s18
      %s20 = sshll.u32 [#allocation4], 4
      %s21 = int_to_ptr.vmem [resolvable:$true] %s20
      %26 = dma.hbm_to_vmem [thread:$0]  %s0, 128, %s21, [#allocation5], 16, 16, 1
    $region5: #{tpu_custom_call.1} parent=1 // pred_fallthru
      _
    // Predicated region
    $region6: #{tpu_custom_call.1} parent=1 // pred_check
      _
    $region7: #{tpu_custom_call.1} parent=1 // pred_check_branch
      %28 = sbr.rel (0) target = $region9
    $region8: #{tpu_custom_call.1} parent=1 // pred_region
      %s30 = ssub.s32 256, 256
      %31 = vsyncadd [#allocation7], %s30
      %s32 = sshll.u32 [#allocation6], 4
      %s33 = int_to_ptr.vmem [resolvable:$true] %s32
      %38 = dma.hbm_to_vmem [thread:$0]  %s1, 256, %s33, [#allocation7], 64, 64, 4
    $region9: #{tpu_custom_call.1} parent=1 // pred_fallthru
      _
    // Predicated region
    $region10: #{tpu_custom_call.1} parent=1 // pred_check
      _
    $region11: #{tpu_custom_call.1} parent=1 // pred_check_branch
      %40 = sbr.rel (0) target = $region13
    $region12: #{tpu_custom_call.1} parent=1 // pred_region
      %s42 = ssub.s32 256, 256
      %43 = vsyncadd [#allocation7], %s42
      %s44 = sshll.u32 [#allocation8], 4
      %s45 = int_to_ptr.vmem [resolvable:$true] %s44
      %50 = dma.hbm_to_vmem [thread:$0]  %s2, 256, %s45, [#allocation7], 64, 64, 4
    $region13: #{tpu_custom_call.1} parent=1 // pred_fallthru
      _
    // Predicated region
    $region14: #{tpu_custom_call.1} parent=1 // pred_check
      _
    $region15: #{tpu_custom_call.1} parent=1 // pred_check_branch
      %52 = sbr.rel (0) target = $region17
    $region16: #{tpu_custom_call.1} parent=1 // pred_region
      _
    $region17: #{tpu_custom_call.1} parent=1 // pred_fallthru
      _
    // Predicated region
    $region18: #{tpu_custom_call.1} parent=1 // pred_check
      _
    $region19: #{tpu_custom_call.1} parent=1 // pred_check_branch
      %54 = sbr.rel (0) target = $region21
    $region20: #{tpu_custom_call.1} parent=1 // pred_region
      _
    $region21: #{tpu_custom_call.1} parent=1 // pred_fallthru
      _
    // Predicated region
    $region22: #{tpu_custom_call.1} parent=1 // pred_check
      _
    $region23: #{tpu_custom_call.1} parent=1 // pred_check_branch
      %56 = sbr.rel (0) target = $region25
    $region24: #{tpu_custom_call.1} parent=1 // pred_region
      _
    $region25: #{tpu_custom_call.1} parent=1 // pred_fallthru
      _
    // Predicated region
    $region26: #{tpu_custom_call.1} parent=1 // pred_check
      _
    $region27: #{tpu_custom_call.1} parent=1 // pred_check_branch
      %58 = sbr.rel (0) target = $region29
    $region28: #{tpu_custom_call.1} parent=1 // pred_region
      %59 = dma.done [#allocation5], 128
    $region29: #{tpu_custom_call.1} parent=1 // pred_fallthru
      _
    // Predicated region
    $region30: #{tpu_custom_call.1} parent=1 // pred_check
      _
    $region31: #{tpu_custom_call.1} parent=1 // pred_check_branch
      %61 = sbr.rel (0) target = $region33
    $region32: #{tpu_custom_call.1} parent=1 // pred_region
      %62 = dma.done [#allocation7], 256
    $region33: #{tpu_custom_call.1} parent=1 // pred_fallthru
      _
    // Predicated region
    $region34: #{tpu_custom_call.1} parent=1 // pred_check
      _
    $region35: #{tpu_custom_call.1} parent=1 // pred_check_branch
      %64 = sbr.rel (0) target = $region37
    $region36: #{tpu_custom_call.1} parent=1 // pred_region
      %65 = dma.done [#allocation7], 256
    $region37: #{tpu_custom_call.1} parent=1 // pred_fallthru
      _
    %p67 = scmp.eq.s32.totalorder 0, 0
    // Predicated region
    $region38: #{tpu_custom_call.1} parent=1 // pred_check
      %p68 = pneg %p67
    $region39: #{tpu_custom_call.1} parent=1 // pred_check_branch
      %70 = sbr.rel (%p68) target = $region41
    $region40: #{tpu_custom_call.1} parent=1 // pred_region
      %vm71 = vcmask 254976
      %72 = vst.msk [vmem:[#allocation2] sm:$0x3] %vm71, 0.0
    $region41: #{tpu_custom_call.1} parent=1 // pred_fallthru
      _
    %v73 = vld [vmem:[#allocation6] sm:$0xf]
    %v74 = vld [vmem:[#allocation6 + $0x4] sm:$0xf]
    %v75 = vld [vmem:[#allocation6 + $0x8] sm:$0xf]
    %v76 = vld [vmem:[#allocation6 + $0xc] sm:$0xf]
    %v77 = vld [vmem:[#allocation8] sm:$0xf]
    %v78 = vld [vmem:[#allocation8 + $0x4] sm:$0xf]
    %v79 = vld [vmem:[#allocation8 + $0x8] sm:$0xf]
    %v80 = vld [vmem:[#allocation8 + $0xc] sm:$0xf]
    %v81 = vld [vmem:[%s3] sm:$0x1]
    %v82 = vld [vmem:[#allocation2] sm:$0x3]
    %v83 = vld [vmem:[#allocation4] sm:$0x1]
    %v85 = vlaneseq
    %v86 = vshrl.u32 %v85, 7
    %v87 = vsub.s32 0, %v86
    %v88 = vrot.slane %v81, %v87
    %v94 = vunpack.c.l.b16 %v73
    %v95 = vunpack.c.l.b16 %v74
    %v96 = vunpack.c.l.b16 %v75
    %v97 = vunpack.c.l.b16 %v76
    %v98 = vpack.c.b16 %v95, %v94
    %v99 = vpack.c.b16 %v97, %v96
    %vm102 = vcmask 261120
    %v104 = vsel %vm102, %v83, 0
    %106 = vmatprep.subr.bf16.mxu0 0
    %107 = vmatpush1.bf16.msra.mxu0 %v98
    %108 = vmatprep.subr.bf16.mxu0 0
    %109 = vmatpush1.bf16.msra.mxu0 %v99
    %110 = vmatprep.subr.bf16.mxu0 0
    %111 = vmatpush1.bf16.msra.mxu0 0
    %112 = vmatprep.subr.bf16.mxu0 0
    %113 = vmatpush1.bf16.msra.mxu0 0
    %114 = vmatprep.subr.bf16.mxu0 0
    %115 = vmatpush1.bf16.msra.mxu0 0
    %116 = vmatprep.subr.bf16.mxu0 0
    %117 = vmatpush1.bf16.msra.mxu0 0
    %118 = vmatprep.subr.bf16.mxu0 0
    %119 = vmatpush1.bf16.msra.mxu0 0
    %120 = vmatprep.subr.bf16.mxu0 0
    %121 = vmatpush1.bf16.msra.mxu0 0
    %122 = vmatprep.subr.bf16.mxu0 0
    %123 = vmatpush1.bf16.msra.mxu0 0
    %124 = vmatprep.subr.bf16.mxu0 0
    %125 = vmatpush1.bf16.msra.mxu0 0
    %126 = vmatprep.subr.bf16.mxu0 0
    %127 = vmatpush1.bf16.msra.mxu0 0
    %128 = vmatprep.subr.bf16.mxu0 0
    %129 = vmatpush1.bf16.msra.mxu0 0
    %130 = vmatprep.subr.bf16.mxu0 0
    %131 = vmatpush1.bf16.msra.mxu0 0
    %132 = vmatprep.subr.bf16.mxu0 0
    %133 = vmatpush1.bf16.msra.mxu0 0
    %134 = vmatprep.subr.bf16.mxu0 0
    %135 = vmatpush1.bf16.msra.mxu0 0
    %136 = vmatprep.subr.bf16.mxu0 0
    %137 = vmatpush1.bf16.msra.mxu0 0
    %138 = vmatprep.mubr.bf16.mxu0 0
    %139 = vmatmul.mubr.bf16.gmra.mrb[0].mxu0 %v104
    %v140 = vpop.f32.mrb[0].mxu0
    %v141 = vadd.f32 %v88, %v140
    %v142 = vpop.f32.mrb[0].mxu0
    %v143 = vpop.f32.mrb[0].mxu0
    %v144 = vpop.f32.mrb[0].mxu0
    %145 = vdwg.mxu0
    %v146 = vpack.c.bf16 %v82, %v82
    %v151 = vunpack.c.l.b16 %v77
    %v152 = vunpack.c.l.b16 %v78
    %v153 = vunpack.c.l.b16 %v79
    %v154 = vunpack.c.l.b16 %v80
    %v155 = vpack.c.b16 %v152, %v151
    %v156 = vpack.c.b16 %v154, %v153
    %v160 = vsel %vm102, %v146, 0
    %162 = vmatprep.subr.bf16.mxu0 0
    %163 = vmatpush1.bf16.msra.mxu0 %v155
    %164 = vmatprep.subr.bf16.mxu0 0
    %165 = vmatpush1.bf16.msra.mxu0 %v156
    %166 = vmatprep.subr.bf16.mxu0 0
    %167 = vmatpush1.bf16.msra.mxu0 0
    %168 = vmatprep.subr.bf16.mxu0 0
    %169 = vmatpush1.bf16.msra.mxu0 0
    %170 = vmatprep.subr.bf16.mxu0 0
    %171 = vmatpush1.bf16.msra.mxu0 0
    %172 = vmatprep.subr.bf16.mxu0 0
    %173 = vmatpush1.bf16.msra.mxu0 0
    %174 = vmatprep.subr.bf16.mxu0 0
    %175 = vmatpush1.bf16.msra.mxu0 0
    %176 = vmatprep.subr.bf16.mxu0 0
    %177 = vmatpush1.bf16.msra.mxu0 0
    %178 = vmatprep.subr.bf16.mxu0 0
    %179 = vmatpush1.bf16.msra.mxu0 0
    %180 = vmatprep.subr.bf16.mxu0 0
    %181 = vmatpush1.bf16.msra.mxu0 0
    %182 = vmatprep.subr.bf16.mxu0 0
    %183 = vmatpush1.bf16.msra.mxu0 0
    %184 = vmatprep.subr.bf16.mxu0 0
    %185 = vmatpush1.bf16.msra.mxu0 0
    %186 = vmatprep.subr.bf16.mxu0 0
    %187 = vmatpush1.bf16.msra.mxu0 0
    %188 = vmatprep.subr.bf16.mxu0 0
    %189 = vmatpush1.bf16.msra.mxu0 0
    %190 = vmatprep.subr.bf16.mxu0 0
    %191 = vmatpush1.bf16.msra.mxu0 0
    %192 = vmatprep.subr.bf16.mxu0 0
    %193 = vmatpush1.bf16.msra.mxu0 0
    %194 = vmatprep.mubr.bf16.mxu0 0
    %195 = vmatmul.mubr.bf16.gmra.mrb[0].mxu0 %v160
    %v196 = vpop.f32.mrb[0].mxu0
    %v197 = vadd.f32 0.0, %v196
    %v198 = vpop.f32.mrb[0].mxu0
    %v199 = vpop.f32.mrb[0].mxu0
    %v200 = vpop.f32.mrb[0].mxu0
    %201 = vdwg.mxu0
    %v202 = vadd.f32 %v141, %v197
    %v203 = vtanh.pop %v202
    %s204 = scalar_lea.vmem [#allocation4], 1
    %v205 = vld [vmem:[%s204] sm:$0x1]
    %v207 = vsel %vm102, %v205, 0
    %209 = vmatprep.subr.bf16.mxu0 0
    %210 = vmatpush1.bf16.msra.mxu0 %v98
    %211 = vmatprep.subr.bf16.mxu0 0
    %212 = vmatpush1.bf16.msra.mxu0 %v99
    %213 = vmatprep.subr.bf16.mxu0 0
    %214 = vmatpush1.bf16.msra.mxu0 0
    %215 = vmatprep.subr.bf16.mxu0 0
    %216 = vmatpush1.bf16.msra.mxu0 0
    %217 = vmatprep.subr.bf16.mxu0 0
    %218 = vmatpush1.bf16.msra.mxu0 0
    %219 = vmatprep.subr.bf16.mxu0 0
    %220 = vmatpush1.bf16.msra.mxu0 0
    %221 = vmatprep.subr.bf16.mxu0 0
    %222 = vmatpush1.bf16.msra.mxu0 0
    %223 = vmatprep.subr.bf16.mxu0 0
    %224 = vmatpush1.bf16.msra.mxu0 0
    %225 = vmatprep.subr.bf16.mxu0 0
    %226 = vmatpush1.bf16.msra.mxu0 0
    %227 = vmatprep.subr.bf16.mxu0 0
    %228 = vmatpush1.bf16.msra.mxu0 0
    %229 = vmatprep.subr.bf16.mxu0 0
    %230 = vmatpush1.bf16.msra.mxu0 0
    %231 = vmatprep.subr.bf16.mxu0 0
    %232 = vmatpush1.bf16.msra.mxu0 0
    %233 = vmatprep.subr.bf16.mxu0 0
    %234 = vmatpush1.bf16.msra.mxu0 0
    %235 = vmatprep.subr.bf16.mxu0 0
    %236 = vmatpush1.bf16.msra.mxu0 0
    %237 = vmatprep.subr.bf16.mxu0 0
    %238 = vmatpush1.bf16.msra.mxu0 0
    %239 = vmatprep.subr.bf16.mxu0 0
    %240 = vmatpush1.bf16.msra.mxu0 0
    %241 = vmatprep.mubr.bf16.mxu0 0
    %242 = vmatmul.mubr.bf16.gmra.mrb[0].mxu0 %v207
    %v243 = vpop.f32.mrb[0].mxu0
    %v244 = vadd.f32 %v88, %v243
    %v245 = vpop.f32.mrb[0].mxu0
    %v246 = vpop.f32.mrb[0].mxu0
    %v247 = vpop.f32.mrb[0].mxu0
    %248 = vdwg.mxu0
    %v249 = vpack.c.bf16 %v203, %v203
    %v251 = vsel %vm102, %v249, 0
    %253 = vmatprep.subr.bf16.mxu0 0
    %254 = vmatpush1.bf16.msra.mxu0 %v155
    %255 = vmatprep.subr.bf16.mxu0 0
    %256 = vmatpush1.bf16.msra.mxu0 %v156
    %257 = vmatprep.subr.bf16.mxu0 0
    %258 = vmatpush1.bf16.msra.mxu0 0
    %259 = vmatprep.subr.bf16.mxu0 0
    %260 = vmatpush1.bf16.msra.mxu0 0
    %261 = vmatprep.subr.bf16.mxu0 0
    %262 = vmatpush1.bf16.msra.mxu0 0
    %263 = vmatprep.subr.bf16.mxu0 0
    %264 = vmatpush1.bf16.msra.mxu0 0
    %265 = vmatprep.subr.bf16.mxu0 0
    %266 = vmatpush1.bf16.msra.mxu0 0
    %267 = vmatprep.subr.bf16.mxu0 0
    %268 = vmatpush1.bf16.msra.mxu0 0
    %269 = vmatprep.subr.bf16.mxu0 0
    %270 = vmatpush1.bf16.msra.mxu0 0
    %271 = vmatprep.subr.bf16.mxu0 0
    %272 = vmatpush1.bf16.msra.mxu0 0
    %273 = vmatprep.subr.bf16.mxu0 0
    %274 = vmatpush1.bf16.msra.mxu0 0
    %275 = vmatprep.subr.bf16.mxu0 0
    %276 = vmatpush1.bf16.msra.mxu0 0
    %277 = vmatprep.subr.bf16.mxu0 0
    %278 = vmatpush1.bf16.msra.mxu0 0
    %279 = vmatprep.subr.bf16.mxu0 0
    %280 = vmatpush1.bf16.msra.mxu0 0
    %281 = vmatprep.subr.bf16.mxu0 0
    %282 = vmatpush1.bf16.msra.mxu0 0
    %283 = vmatprep.subr.bf16.mxu0 0
    %284 = vmatpush1.bf16.msra.mxu0 0
    %285 = vmatprep.mubr.bf16.mxu0 0
    %286 = vmatmul.mubr.bf16.gmra.mrb[0].mxu0 %v251
    %v287 = vpop.f32.mrb[0].mxu0
    %v288 = vadd.f32 0.0, %v287
    %v289 = vpop.f32.mrb[0].mxu0
    %v290 = vpop.f32.mrb[0].mxu0
    %v291 = vpop.f32.mrb[0].mxu0
    %292 = vdwg.mxu0
    %v293 = vadd.f32 %v244, %v288
    %v294 = vtanh.pop %v293
    %s295 = scalar_lea.vmem [#allocation4], 2
    %v296 = vld [vmem:[%s295] sm:$0x1]
    %v298 = vsel %vm102, %v296, 0
    %300 = vmatprep.subr.bf16.mxu0 0
    %301 = vmatpush1.bf16.msra.mxu0 %v98
    %302 = vmatprep.subr.bf16.mxu0 0
    %303 = vmatpush1.bf16.msra.mxu0 %v99
    %304 = vmatprep.subr.bf16.mxu0 0
    %305 = vmatpush1.bf16.msra.mxu0 0
    %306 = vmatprep.subr.bf16.mxu0 0
    %307 = vmatpush1.bf16.msra.mxu0 0
    %308 = vmatprep.subr.bf16.mxu0 0
    %309 = vmatpush1.bf16.msra.mxu0 0
    %310 = vmatprep.subr.bf16.mxu0 0
    %311 = vmatpush1.bf16.msra.mxu0 0
    %312 = vmatprep.subr.bf16.mxu0 0
    %313 = vmatpush1.bf16.msra.mxu0 0
    %314 = vmatprep.subr.bf16.mxu0 0
    %315 = vmatpush1.bf16.msra.mxu0 0
    %316 = vmatprep.subr.bf16.mxu0 0
    %317 = vmatpush1.bf16.msra.mxu0 0
    %318 = vmatprep.subr.bf16.mxu0 0
    %319 = vmatpush1.bf16.msra.mxu0 0
    %320 = vmatprep.subr.bf16.mxu0 0
    %321 = vmatpush1.bf16.msra.mxu0 0
    %322 = vmatprep.subr.bf16.mxu0 0
    %323 = vmatpush1.bf16.msra.mxu0 0
    %324 = vmatprep.subr.bf16.mxu0 0
    %325 = vmatpush1.bf16.msra.mxu0 0
    %326 = vmatprep.subr.bf16.mxu0 0
    %327 = vmatpush1.bf16.msra.mxu0 0
    %328 = vmatprep.subr.bf16.mxu0 0
    %329 = vmatpush1.bf16.msra.mxu0 0
    %330 = vmatprep.subr.bf16.mxu0 0
    %331 = vmatpush1.bf16.msra.mxu0 0
    %332 = vmatprep.mubr.bf16.mxu0 0
    %333 = vmatmul.mubr.bf16.gmra.mrb[0].mxu0 %v298
    %v334 = vpop.f32.mrb[0].mxu0
    %v335 = vadd.f32 %v88, %v334
    %v336 = vpop.f32.mrb[0].mxu0
    %v337 = vpop.f32.mrb[0].mxu0
    %v338 = vpop.f32.mrb[0].mxu0
    %339 = vdwg.mxu0
    %v340 = vpack.c.bf16 %v294, %v294
    %v342 = vsel %vm102, %v340, 0
    %344 = vmatprep.subr.bf16.mxu0 0
    %345 = vmatpush1.bf16.msra.mxu0 %v155
    %346 = vmatprep.subr.bf16.mxu0 0
    %347 = vmatpush1.bf16.msra.mxu0 %v156
    %348 = vmatprep.subr.bf16.mxu0 0
    %349 = vmatpush1.bf16.msra.mxu0 0
    %350 = vmatprep.subr.bf16.mxu0 0
    %351 = vmatpush1.bf16.msra.mxu0 0
    %352 = vmatprep.subr.bf16.mxu0 0
    %353 = vmatpush1.bf16.msra.mxu0 0
    %354 = vmatprep.subr.bf16.mxu0 0
    %355 = vmatpush1.bf16.msra.mxu0 0
    %356 = vmatprep.subr.bf16.mxu0 0
    %357 = vmatpush1.bf16.msra.mxu0 0
    %358 = vmatprep.subr.bf16.mxu0 0
    %359 = vmatpush1.bf16.msra.mxu0 0
    %360 = vmatprep.subr.bf16.mxu0 0
    %361 = vmatpush1.bf16.msra.mxu0 0
    %362 = vmatprep.subr.bf16.mxu0 0
    %363 = vmatpush1.bf16.msra.mxu0 0
    %364 = vmatprep.subr.bf16.mxu0 0
    %365 = vmatpush1.bf16.msra.mxu0 0
    %366 = vmatprep.subr.bf16.mxu0 0
    %367 = vmatpush1.bf16.msra.mxu0 0
    %368 = vmatprep.subr.bf16.mxu0 0
    %369 = vmatpush1.bf16.msra.mxu0 0
    %370 = vmatprep.subr.bf16.mxu0 0
    %371 = vmatpush1.bf16.msra.mxu0 0
    %372 = vmatprep.subr.bf16.mxu0 0
    %373 = vmatpush1.bf16.msra.mxu0 0
    %374 = vmatprep.subr.bf16.mxu0 0
    %375 = vmatpush1.bf16.msra.mxu0 0
    %376 = vmatprep.mubr.bf16.mxu0 0
    %377 = vmatmul.mubr.bf16.gmra.mrb[0].mxu0 %v342
    %v378 = vpop.f32.mrb[0].mxu0
    %v379 = vadd.f32 0.0, %v378
    %v380 = vpop.f32.mrb[0].mxu0
    %v381 = vpop.f32.mrb[0].mxu0
    %v382 = vpop.f32.mrb[0].mxu0
    %383 = vdwg.mxu0
    %v384 = vadd.f32 %v335, %v379
    %v385 = vtanh.pop %v384
    %s386 = scalar_lea.vmem [#allocation4], 3
    %v387 = vld [vmem:[%s386] sm:$0x1]
    %v389 = vsel %vm102, %v387, 0
    %391 = vmatprep.subr.bf16.mxu0 0
    %392 = vmatpush1.bf16.msra.mxu0 %v98
    %393 = vmatprep.subr.bf16.mxu0 0
    %394 = vmatpush1.bf16.msra.mxu0 %v99
    %395 = vmatprep.subr.bf16.mxu0 0
    %396 = vmatpush1.bf16.msra.mxu0 0
    %397 = vmatprep.subr.bf16.mxu0 0
    %398 = vmatpush1.bf16.msra.mxu0 0
    %399 = vmatprep.subr.bf16.mxu0 0
    %400 = vmatpush1.bf16.msra.mxu0 0
    %401 = vmatprep.subr.bf16.mxu0 0
    %402 = vmatpush1.bf16.msra.mxu0 0
    %403 = vmatprep.subr.bf16.mxu0 0
    %404 = vmatpush1.bf16.msra.mxu0 0
    %405 = vmatprep.subr.bf16.mxu0 0
    %406 = vmatpush1.bf16.msra.mxu0 0
    %407 = vmatprep.subr.bf16.mxu0 0
    %408 = vmatpush1.bf16.msra.mxu0 0
    %409 = vmatprep.subr.bf16.mxu0 0
    %410 = vmatpush1.bf16.msra.mxu0 0
    %411 = vmatprep.subr.bf16.mxu0 0
    %412 = vmatpush1.bf16.msra.mxu0 0
    %413 = vmatprep.subr.bf16.mxu0 0
    %414 = vmatpush1.bf16.msra.mxu0 0
    %415 = vmatprep.subr.bf16.mxu0 0
    %416 = vmatpush1.bf16.msra.mxu0 0
    %417 = vmatprep.subr.bf16.mxu0 0
    %418 = vmatpush1.bf16.msra.mxu0 0
    %419 = vmatprep.subr.bf16.mxu0 0
    %420 = vmatpush1.bf16.msra.mxu0 0
    %421 = vmatprep.subr.bf16.mxu0 0
    %422 = vmatpush1.bf16.msra.mxu0 0
    %423 = vmatprep.mubr.bf16.mxu0 0
    %424 = vmatmul.mubr.bf16.gmra.mrb[0].mxu0 %v389
    %v425 = vpop.f32.mrb[0].mxu0
    %v426 = vadd.f32 %v88, %v425
    %v427 = vpop.f32.mrb[0].mxu0
    %v428 = vpop.f32.mrb[0].mxu0
    %v429 = vpop.f32.mrb[0].mxu0
    %430 = vdwg.mxu0
    %v431 = vpack.c.bf16 %v385, %v385
    %v433 = vsel %vm102, %v431, 0
    %435 = vmatprep.subr.bf16.mxu0 0
    %436 = vmatpush1.bf16.msra.mxu0 %v155
    %437 = vmatprep.subr.bf16.mxu0 0
    %438 = vmatpush1.bf16.msra.mxu0 %v156
    %439 = vmatprep.subr.bf16.mxu0 0
    %440 = vmatpush1.bf16.msra.mxu0 0
    %441 = vmatprep.subr.bf16.mxu0 0
    %442 = vmatpush1.bf16.msra.mxu0 0
    %443 = vmatprep.subr.bf16.mxu0 0
    %444 = vmatpush1.bf16.msra.mxu0 0
    %445 = vmatprep.subr.bf16.mxu0 0
    %446 = vmatpush1.bf16.msra.mxu0 0
    %447 = vmatprep.subr.bf16.mxu0 0
    %448 = vmatpush1.bf16.msra.mxu0 0
    %449 = vmatprep.subr.bf16.mxu0 0
    %450 = vmatpush1.bf16.msra.mxu0 0
    %451 = vmatprep.subr.bf16.mxu0 0
    %452 = vmatpush1.bf16.msra.mxu0 0
    %453 = vmatprep.subr.bf16.mxu0 0
    %454 = vmatpush1.bf16.msra.mxu0 0
    %455 = vmatprep.subr.bf16.mxu0 0
    %456 = vmatpush1.bf16.msra.mxu0 0
    %457 = vmatprep.subr.bf16.mxu0 0
    %458 = vmatpush1.bf16.msra.mxu0 0
    %459 = vmatprep.subr.bf16.mxu0 0
    %460 = vmatpush1.bf16.msra.mxu0 0
    %461 = vmatprep.subr.bf16.mxu0 0
    %462 = vmatpush1.bf16.msra.mxu0 0
    %463 = vmatprep.subr.bf16.mxu0 0
    %464 = vmatpush1.bf16.msra.mxu0 0
    %465 = vmatprep.subr.bf16.mxu0 0
    %466 = vmatpush1.bf16.msra.mxu0 0
    %467 = vmatprep.mubr.bf16.mxu0 0
    %468 = vmatmul.mubr.bf16.gmra.mrb[0].mxu0 %v433
    %v469 = vpop.f32.mrb[0].mxu0
    %v470 = vadd.f32 0.0, %v469
    %v471 = vpop.f32.mrb[0].mxu0
    %v472 = vpop.f32.mrb[0].mxu0
    %v473 = vpop.f32.mrb[0].mxu0
    %474 = vdwg.mxu0
    %v475 = vadd.f32 %v426, %v470
    %v476 = vtanh.pop %v475
    %s477 = scalar_lea.vmem [#allocation4], 4
    %v478 = vld [vmem:[%s477] sm:$0x1]
    %v480 = vsel %vm102, %v478, 0
    %482 = vmatprep.subr.bf16.mxu0 0
    %483 = vmatpush1.bf16.msra.mxu0 %v98
    %484 = vmatprep.subr.bf16.mxu0 0
    %485 = vmatpush1.bf16.msra.mxu0 %v99
    %486 = vmatprep.subr.bf16.mxu0 0
    %487 = vmatpush1.bf16.msra.mxu0 0
    %488 = vmatprep.subr.bf16.mxu0 0
    %489 = vmatpush1.bf16.msra.mxu0 0
    %490 = vmatprep.subr.bf16.mxu0 0
    %491 = vmatpush1.bf16.msra.mxu0 0
    %492 = vmatprep.subr.bf16.mxu0 0
    %493 = vmatpush1.bf16.msra.mxu0 0
    %494 = vmatprep.subr.bf16.mxu0 0
    %495 = vmatpush1.bf16.msra.mxu0 0
    %496 = vmatprep.subr.bf16.mxu0 0
    %497 = vmatpush1.bf16.msra.mxu0 0
    %498 = vmatprep.subr.bf16.mxu0 0
    %499 = vmatpush1.bf16.msra.mxu0 0
    %500 = vmatprep.subr.bf16.mxu0 0
    %501 = vmatpush1.bf16.msra.mxu0 0
    %502 = vmatprep.subr.bf16.mxu0 0
    %503 = vmatpush1.bf16.msra.mxu0 0
    %504 = vmatprep.subr.bf16.mxu0 0
    %505 = vmatpush1.bf16.msra.mxu0 0
    %506 = vmatprep.subr.bf16.mxu0 0
    %507 = vmatpush1.bf16.msra.mxu0 0
    %508 = vmatprep.subr.bf16.mxu0 0
    %509 = vmatpush1.bf16.msra.mxu0 0
    %510 = vmatprep.subr.bf16.mxu0 0
    %511 = vmatpush1.bf16.msra.mxu0 0
    %512 = vmatprep.subr.bf16.mxu0 0
    %513 = vmatpush1.bf16.msra.mxu0 0
    %514 = vmatprep.mubr.bf16.mxu0 0
    %515 = vmatmul.mubr.bf16.gmra.mrb[0].mxu0 %v480
    %v516 = vpop.f32.mrb[0].mxu0
    %v517 = vadd.f32 %v88, %v516
    %v518 = vpop.f32.mrb[0].mxu0
    %v519 = vpop.f32.mrb[0].mxu0
    %v520 = vpop.f32.mrb[0].mxu0
    %521 = vdwg.mxu0
    %v522 = vpack.c.bf16 %v476, %v476
    %v524 = vsel %vm102, %v522, 0
    %526 = vmatprep.subr.bf16.mxu0 0
    %527 = vmatpush1.bf16.msra.mxu0 %v155
    %528 = vmatprep.subr.bf16.mxu0 0
    %529 = vmatpush1.bf16.msra.mxu0 %v156
    %530 = vmatprep.subr.bf16.mxu0 0
    %531 = vmatpush1.bf16.msra.mxu0 0
    %532 = vmatprep.subr.bf16.mxu0 0
    %533 = vmatpush1.bf16.msra.mxu0 0
    %534 = vmatprep.subr.bf16.mxu0 0
    %535 = vmatpush1.bf16.msra.mxu0 0
    %536 = vmatprep.subr.bf16.mxu0 0
    %537 = vmatpush1.bf16.msra.mxu0 0
    %538 = vmatprep.subr.bf16.mxu0 0
    %539 = vmatpush1.bf16.msra.mxu0 0
    %540 = vmatprep.subr.bf16.mxu0 0
    %541 = vmatpush1.bf16.msra.mxu0 0
    %542 = vmatprep.subr.bf16.mxu0 0
    %543 = vmatpush1.bf16.msra.mxu0 0
    %544 = vmatprep.subr.bf16.mxu0 0
    %545 = vmatpush1.bf16.msra.mxu0 0
    %546 = vmatprep.subr.bf16.mxu0 0
    %547 = vmatpush1.bf16.msra.mxu0 0
    %548 = vmatprep.subr.bf16.mxu0 0
    %549 = vmatpush1.bf16.msra.mxu0 0
    %550 = vmatprep.subr.bf16.mxu0 0
    %551 = vmatpush1.bf16.msra.mxu0 0
    %552 = vmatprep.subr.bf16.mxu0 0
    %553 = vmatpush1.bf16.msra.mxu0 0
    %554 = vmatprep.subr.bf16.mxu0 0
    %555 = vmatpush1.bf16.msra.mxu0 0
    %556 = vmatprep.subr.bf16.mxu0 0
    %557 = vmatpush1.bf16.msra.mxu0 0
    %558 = vmatprep.mubr.bf16.mxu0 0
    %559 = vmatmul.mubr.bf16.gmra.mrb[0].mxu0 %v524
    %v560 = vpop.f32.mrb[0].mxu0
    %v561 = vadd.f32 0.0, %v560
    %v562 = vpop.f32.mrb[0].mxu0
    %v563 = vpop.f32.mrb[0].mxu0
    %v564 = vpop.f32.mrb[0].mxu0
    %565 = vdwg.mxu0
    %v566 = vadd.f32 %v517, %v561
    %v567 = vtanh.pop %v566
    %s568 = scalar_lea.vmem [#allocation4], 5
    %v569 = vld [vmem:[%s568] sm:$0x1]
    %v571 = vsel %vm102, %v569, 0
    %573 = vmatprep.subr.bf16.mxu0 0
    %574 = vmatpush1.bf16.msra.mxu0 %v98
    %575 = vmatprep.subr.bf16.mxu0 0
    %576 = vmatpush1.bf16.msra.mxu0 %v99
    %577 = vmatprep.subr.bf16.mxu0 0
    %578 = vmatpush1.bf16.msra.mxu0 0
    %579 = vmatprep.subr.bf16.mxu0 0
    %580 = vmatpush1.bf16.msra.mxu0 0
    %581 = vmatprep.subr.bf16.mxu0 0
    %582 = vmatpush1.bf16.msra.mxu0 0
    %583 = vmatprep.subr.bf16.mxu0 0
    %584 = vmatpush1.bf16.msra.mxu0 0
    %585 = vmatprep.subr.bf16.mxu0 0
    %586 = vmatpush1.bf16.msra.mxu0 0
    %587 = vmatprep.subr.bf16.mxu0 0
    %588 = vmatpush1.bf16.msra.mxu0 0
    %589 = vmatprep.subr.bf16.mxu0 0
    %590 = vmatpush1.bf16.msra.mxu0 0
    %591 = vmatprep.subr.bf16.mxu0 0
    %592 = vmatpush1.bf16.msra.mxu0 0
    %593 = vmatprep.subr.bf16.mxu0 0
    %594 = vmatpush1.bf16.msra.mxu0 0
    %595 = vmatprep.subr.bf16.mxu0 0
    %596 = vmatpush1.bf16.msra.mxu0 0
    %597 = vmatprep.subr.bf16.mxu0 0
    %598 = vmatpush1.bf16.msra.mxu0 0
    %599 = vmatprep.subr.bf16.mxu0 0
    %600 = vmatpush1.bf16.msra.mxu0 0
    %601 = vmatprep.subr.bf16.mxu0 0
    %602 = vmatpush1.bf16.msra.mxu0 0
    %603 = vmatprep.subr.bf16.mxu0 0
    %604 = vmatpush1.bf16.msra.mxu0 0
    %605 = vmatprep.mubr.bf16.mxu0 0
    %606 = vmatmul.mubr.bf16.gmra.mrb[0].mxu0 %v571
    %v607 = vpop.f32.mrb[0].mxu0
    %v608 = vadd.f32 %v88, %v607
    %v609 = vpop.f32.mrb[0].mxu0
    %v610 = vpop.f32.mrb[0].mxu0
    %v611 = vpop.f32.mrb[0].mxu0
    %612 = vdwg.mxu0
    %v613 = vpack.c.bf16 %v567, %v567
    %v615 = vsel %vm102, %v613, 0
    %617 = vmatprep.subr.bf16.mxu0 0
    %618 = vmatpush1.bf16.msra.mxu0 %v155
    %619 = vmatprep.subr.bf16.mxu0 0
    %620 = vmatpush1.bf16.msra.mxu0 %v156
    %621 = vmatprep.subr.bf16.mxu0 0
    %622 = vmatpush1.bf16.msra.mxu0 0
    %623 = vmatprep.subr.bf16.mxu0 0
    %624 = vmatpush1.bf16.msra.mxu0 0
    %625 = vmatprep.subr.bf16.mxu0 0
    %626 = vmatpush1.bf16.msra.mxu0 0
    %627 = vmatprep.subr.bf16.mxu0 0
    %628 = vmatpush1.bf16.msra.mxu0 0
    %629 = vmatprep.subr.bf16.mxu0 0
    %630 = vmatpush1.bf16.msra.mxu0 0
    %631 = vmatprep.subr.bf16.mxu0 0
    %632 = vmatpush1.bf16.msra.mxu0 0
    %633 = vmatprep.subr.bf16.mxu0 0
    %634 = vmatpush1.bf16.msra.mxu0 0
    %635 = vmatprep.subr.bf16.mxu0 0
    %636 = vmatpush1.bf16.msra.mxu0 0
    %637 = vmatprep.subr.bf16.mxu0 0
    %638 = vmatpush1.bf16.msra.mxu0 0
    %639 = vmatprep.subr.bf16.mxu0 0
    %640 = vmatpush1.bf16.msra.mxu0 0
    %641 = vmatprep.subr.bf16.mxu0 0
    %642 = vmatpush1.bf16.msra.mxu0 0
    %643 = vmatprep.subr.bf16.mxu0 0
    %644 = vmatpush1.bf16.msra.mxu0 0
    %645 = vmatprep.subr.bf16.mxu0 0
    %646 = vmatpush1.bf16.msra.mxu0 0
    %647 = vmatprep.subr.bf16.mxu0 0
    %648 = vmatpush1.bf16.msra.mxu0 0
    %649 = vmatprep.mubr.bf16.mxu0 0
    %650 = vmatmul.mubr.bf16.gmra.mrb[0].mxu0 %v615
    %v651 = vpop.f32.mrb[0].mxu0
    %v652 = vadd.f32 0.0, %v651
    %v653 = vpop.f32.mrb[0].mxu0
    %v654 = vpop.f32.mrb[0].mxu0
    %v655 = vpop.f32.mrb[0].mxu0
    %656 = vdwg.mxu0
    %v657 = vadd.f32 %v608, %v652
    %v658 = vtanh.pop %v657
    %s659 = scalar_lea.vmem [#allocation4], 6
    %v660 = vld [vmem:[%s659] sm:$0x1]
    %v662 = vsel %vm102, %v660, 0
    %664 = vmatprep.subr.bf16.mxu0 0
    %665 = vmatpush1.bf16.msra.mxu0 %v98
    %666 = vmatprep.subr.bf16.mxu0 0
    %667 = vmatpush1.bf16.msra.mxu0 %v99
    %668 = vmatprep.subr.bf16.mxu0 0
    %669 = vmatpush1.bf16.msra.mxu0 0
    %670 = vmatprep.subr.bf16.mxu0 0
    %671 = vmatpush1.bf16.msra.mxu0 0
    %672 = vmatprep.subr.bf16.mxu0 0
    %673 = vmatpush1.bf16.msra.mxu0 0
    %674 = vmatprep.subr.bf16.mxu0 0
    %675 = vmatpush1.bf16.msra.mxu0 0
    %676 = vmatprep.subr.bf16.mxu0 0
    %677 = vmatpush1.bf16.msra.mxu0 0
    %678 = vmatprep.subr.bf16.mxu0 0
    %679 = vmatpush1.bf16.msra.mxu0 0
    %680 = vmatprep.subr.bf16.mxu0 0
    %681 = vmatpush1.bf16.msra.mxu0 0
    %682 = vmatprep.subr.bf16.mxu0 0
    %683 = vmatpush1.bf16.msra.mxu0 0
    %684 = vmatprep.subr.bf16.mxu0 0
    %685 = vmatpush1.bf16.msra.mxu0 0
    %686 = vmatprep.subr.bf16.mxu0 0
    %687 = vmatpush1.bf16.msra.mxu0 0
    %688 = vmatprep.subr.bf16.mxu0 0
    %689 = vmatpush1.bf16.msra.mxu0 0
    %690 = vmatprep.subr.bf16.mxu0 0
    %691 = vmatpush1.bf16.msra.mxu0 0
    %692 = vmatprep.subr.bf16.mxu0 0
    %693 = vmatpush1.bf16.msra.mxu0 0
    %694 = vmatprep.subr.bf16.mxu0 0
    %695 = vmatpush1.bf16.msra.mxu0 0
    %696 = vmatprep.mubr.bf16.mxu0 0
    %697 = vmatmul.mubr.bf16.gmra.mrb[0].mxu0 %v662
    %v698 = vpop.f32.mrb[0].mxu0
    %v699 = vadd.f32 %v88, %v698
    %v700 = vpop.f32.mrb[0].mxu0
    %v701 = vpop.f32.mrb[0].mxu0
    %v702 = vpop.f32.mrb[0].mxu0
    %703 = vdwg.mxu0
    %v704 = vpack.c.bf16 %v658, %v658
    %v706 = vsel %vm102, %v704, 0
    %708 = vmatprep.subr.bf16.mxu0 0
    %709 = vmatpush1.bf16.msra.mxu0 %v155
    %710 = vmatprep.subr.bf16.mxu0 0
    %711 = vmatpush1.bf16.msra.mxu0 %v156
    %712 = vmatprep.subr.bf16.mxu0 0
    %713 = vmatpush1.bf16.msra.mxu0 0
    %714 = vmatprep.subr.bf16.mxu0 0
    %715 = vmatpush1.bf16.msra.mxu0 0
    %716 = vmatprep.subr.bf16.mxu0 0
    %717 = vmatpush1.bf16.msra.mxu0 0
    %718 = vmatprep.subr.bf16.mxu0 0
    %719 = vmatpush1.bf16.msra.mxu0 0
    %720 = vmatprep.subr.bf16.mxu0 0
    %721 = vmatpush1.bf16.msra.mxu0 0
    %722 = vmatprep.subr.bf16.mxu0 0
    %723 = vmatpush1.bf16.msra.mxu0 0
    %724 = vmatprep.subr.bf16.mxu0 0
    %725 = vmatpush1.bf16.msra.mxu0 0
    %726 = vmatprep.subr.bf16.mxu0 0
    %727 = vmatpush1.bf16.msra.mxu0 0
    %728 = vmatprep.subr.bf16.mxu0 0
    %729 = vmatpush1.bf16.msra.mxu0 0
    %730 = vmatprep.subr.bf16.mxu0 0
    %731 = vmatpush1.bf16.msra.mxu0 0
    %732 = vmatprep.subr.bf16.mxu0 0
    %733 = vmatpush1.bf16.msra.mxu0 0
    %734 = vmatprep.subr.bf16.mxu0 0
    %735 = vmatpush1.bf16.msra.mxu0 0
    %736 = vmatprep.subr.bf16.mxu0 0
    %737 = vmatpush1.bf16.msra.mxu0 0
    %738 = vmatprep.subr.bf16.mxu0 0
    %739 = vmatpush1.bf16.msra.mxu0 0
    %740 = vmatprep.mubr.bf16.mxu0 0
    %741 = vmatmul.mubr.bf16.gmra.mrb[0].mxu0 %v706
    %v742 = vpop.f32.mrb[0].mxu0
    %v743 = vadd.f32 0.0, %v742
    %v744 = vpop.f32.mrb[0].mxu0
    %v745 = vpop.f32.mrb[0].mxu0
    %v746 = vpop.f32.mrb[0].mxu0
    %747 = vdwg.mxu0
    %v748 = vadd.f32 %v699, %v743
    %v749 = vtanh.pop %v748
    %s750 = scalar_lea.vmem [#allocation4], 7
    %v751 = vld [vmem:[%s750] sm:$0x1]
    %v753 = vsel %vm102, %v751, 0
    %755 = vmatprep.subr.bf16.mxu0 0
    %756 = vmatpush1.bf16.msra.mxu0 %v98
    %757 = vmatprep.subr.bf16.mxu0 0
    %758 = vmatpush1.bf16.msra.mxu0 %v99
    %759 = vmatprep.subr.bf16.mxu0 0
    %760 = vmatpush1.bf16.msra.mxu0 0
    %761 = vmatprep.subr.bf16.mxu0 0
    %762 = vmatpush1.bf16.msra.mxu0 0
    %763 = vmatprep.subr.bf16.mxu0 0
    %764 = vmatpush1.bf16.msra.mxu0 0
    %765 = vmatprep.subr.bf16.mxu0 0
    %766 = vmatpush1.bf16.msra.mxu0 0
    %767 = vmatprep.subr.bf16.mxu0 0
    %768 = vmatpush1.bf16.msra.mxu0 0
    %769 = vmatprep.subr.bf16.mxu0 0
    %770 = vmatpush1.bf16.msra.mxu0 0
    %771 = vmatprep.subr.bf16.mxu0 0
    %772 = vmatpush1.bf16.msra.mxu0 0
    %773 = vmatprep.subr.bf16.mxu0 0
    %774 = vmatpush1.bf16.msra.mxu0 0
    %775 = vmatprep.subr.bf16.mxu0 0
    %776 = vmatpush1.bf16.msra.mxu0 0
    %777 = vmatprep.subr.bf16.mxu0 0
    %778 = vmatpush1.bf16.msra.mxu0 0
    %779 = vmatprep.subr.bf16.mxu0 0
    %780 = vmatpush1.bf16.msra.mxu0 0
    %781 = vmatprep.subr.bf16.mxu0 0
    %782 = vmatpush1.bf16.msra.mxu0 0
    %783 = vmatprep.subr.bf16.mxu0 0
    %784 = vmatpush1.bf16.msra.mxu0 0
    %785 = vmatprep.subr.bf16.mxu0 0
    %786 = vmatpush1.bf16.msra.mxu0 0
    %787 = vmatprep.mubr.bf16.mxu0 0
    %788 = vmatmul.mubr.bf16.gmra.mrb[0].mxu0 %v753
    %v789 = vpop.f32.mrb[0].mxu0
    %v790 = vadd.f32 %v88, %v789
    %v791 = vpop.f32.mrb[0].mxu0
    %v792 = vpop.f32.mrb[0].mxu0
    %v793 = vpop.f32.mrb[0].mxu0
    %794 = vdwg.mxu0
    %v795 = vpack.c.bf16 %v749, %v749
    %v797 = vsel %vm102, %v795, 0
    %799 = vmatprep.subr.bf16.mxu0 0
    %800 = vmatpush1.bf16.msra.mxu0 %v155
    %801 = vmatprep.subr.bf16.mxu0 0
    %802 = vmatpush1.bf16.msra.mxu0 %v156
    %803 = vmatprep.subr.bf16.mxu0 0
    %804 = vmatpush1.bf16.msra.mxu0 0
    %805 = vmatprep.subr.bf16.mxu0 0
    %806 = vmatpush1.bf16.msra.mxu0 0
    %807 = vmatprep.subr.bf16.mxu0 0
    %808 = vmatpush1.bf16.msra.mxu0 0
    %809 = vmatprep.subr.bf16.mxu0 0
    %810 = vmatpush1.bf16.msra.mxu0 0
    %811 = vmatprep.subr.bf16.mxu0 0
    %812 = vmatpush1.bf16.msra.mxu0 0
    %813 = vmatprep.subr.bf16.mxu0 0
    %814 = vmatpush1.bf16.msra.mxu0 0
    %815 = vmatprep.subr.bf16.mxu0 0
    %816 = vmatpush1.bf16.msra.mxu0 0
    %817 = vmatprep.subr.bf16.mxu0 0
    %818 = vmatpush1.bf16.msra.mxu0 0
    %819 = vmatprep.subr.bf16.mxu0 0
    %820 = vmatpush1.bf16.msra.mxu0 0
    %821 = vmatprep.subr.bf16.mxu0 0
    %822 = vmatpush1.bf16.msra.mxu0 0
    %823 = vmatprep.subr.bf16.mxu0 0
    %824 = vmatpush1.bf16.msra.mxu0 0
    %825 = vmatprep.subr.bf16.mxu0 0
    %826 = vmatpush1.bf16.msra.mxu0 0
    %827 = vmatprep.subr.bf16.mxu0 0
    %828 = vmatpush1.bf16.msra.mxu0 0
    %829 = vmatprep.subr.bf16.mxu0 0
    %830 = vmatpush1.bf16.msra.mxu0 0
    %831 = vmatprep.mubr.bf16.mxu0 0
    %832 = vmatmul.mubr.bf16.gmra.mrb[0].mxu0 %v797
    %v833 = vpop.f32.mrb[0].mxu0
    %v834 = vadd.f32 0.0, %v833
    %v835 = vpop.f32.mrb[0].mxu0
    %v836 = vpop.f32.mrb[0].mxu0
    %v837 = vpop.f32.mrb[0].mxu0
    %838 = vdwg.mxu0
    %v839 = vadd.f32 %v790, %v834
    %v840 = vtanh.pop %v839
    %vm841 = vcmask 254976
    %842 = vst.msk [vmem:[#allocation2] sm:$0x3] %vm841, %v840
    // Predicated region
    $region42: #{tpu_custom_call.1} parent=1 // pred_check
      %p843 = pneg %p67
    $region43: #{tpu_custom_call.1} parent=1 // pred_check_branch
      %845 = sbr.rel (%p843) target = $region45
    $region44: #{tpu_custom_call.1} parent=1 // pred_region
      %v846 = vld [vmem:[%s4] sm:$0x1]
      %v848 = vlaneseq
      %v849 = vshrl.u32 %v848, 7
      %v850 = vsub.s32 0, %v849
      %v851 = vrot.slane %v846, %v850
      %v853 = vmul.f32 %v840, %v851
      %v854 = vsel %vm841, %v853, 0.0
      %855 = vadd.xlane.f32.xlu0 %v854
      %v856 = vpop.xlane.xlu0 %855
      %v857 = vld [vmem:[#allocation3] sm:$0x1]
      %v859 = vlaneseq
      %v860 = vshrl.u32 %v859, 7
      %v861 = vsub.s32 0, %v860
      %v862 = vrot.slane %v857, %v861
      %v864 = vadd.f32 %v856, %v862
      %v865 = vsub.f32 0.0, %v864
      %v866 = vmul.f32 %v865, 1.442695
      %v867 = vpow.pop %v866
      %v868 = vadd.f32 %v867, 1.0
      %v869 = vrcp.pop %v868
      %v870 = vmul.f32 1.0, %v869
      %vm871 = vcmask 1024
      %872 = vst.msk [vmem:[%s6] sm:$0x3] %vm871, %v870
    $region45: #{tpu_custom_call.1} parent=1 // pred_fallthru
      _
    // Predicated region
    $region46: #{tpu_custom_call.1} parent=1 // pred_check
      _
    $region47: #{tpu_custom_call.1} parent=1 // pred_check_branch
      %874 = sbr.rel (0) target = $region49
    $region48: #{tpu_custom_call.1} parent=1 // pred_region
      _
    $region49: #{tpu_custom_call.1} parent=1 // pred_fallthru
      _
    // Predicated region
    $region50: #{tpu_custom_call.1} parent=1 // pred_check
      _
    $region51: #{tpu_custom_call.1} parent=1 // pred_check_branch
      %876 = sbr.rel (0) target = $region53
    $region52: #{tpu_custom_call.1} parent=1 // pred_region
      _
    $region53: #{tpu_custom_call.1} parent=1 // pred_fallthru
      _
    %877 = vsyncpa [#allocation5], 1
    %878 = vsyncpa [#allocation7], 1

</llo_original>
